<compile_context>
chip_gen: v6e
topology: v6e:2x2x1
jax: 0.10.0
libtpu: 0.0.40
codegen_flags: <defaults>
</compile_context>

<pallas_src>
import jax
import jax.numpy as jnp
from jax.experimental import pallas as pl
from jax.experimental.pallas import tpu as pltpu


def encoder_kernel(x_ref, w1_ref, b1_ref, w2_ref, b2_ref, w3_ref, b3_ref,
                   w4m_ref, b4m_ref, w4v_ref, b4v_ref, eps_ref, out_ref):
    # MXU operand dtype = dtype the wrapper pre-cast x / weights to.
    cd = w1_ref.dtype

    # ---- MLP: Linear -> ReLU (x3); f32 accumulation, f32 elementwise -------
    h = jnp.dot(x_ref[...], w1_ref[...], preferred_element_type=jnp.float32)
    h = jnp.maximum(h + b1_ref[...], 0.0)

    h = jnp.dot(h.astype(cd), w2_ref[...], preferred_element_type=jnp.float32)
    h = jnp.maximum(h + b2_ref[...], 0.0)

    h = jnp.dot(h.astype(cd), w3_ref[...], preferred_element_type=jnp.float32)
    h = jnp.maximum(h + b3_ref[...], 0.0)
    h = h.astype(cd)

    # ---- final Linear, pre-split into mean / log_var column halves ---------
    mean = jnp.dot(h, w4m_ref[...],
                   preferred_element_type=jnp.float32) + b4m_ref[...]
    log_var = jnp.dot(h, w4v_ref[...],
                      preferred_element_type=jnp.float32) + b4v_ref[...]

    # ---- clamp, reparameterize (all f32 on the VPU/EUP) ---------------------
    log_var = jnp.clip(log_var, -10.0, 10.0)
    std = jnp.exp(0.5 * log_var)
    out_ref[...] = (mean + std * eps_ref[...]).astype(out_ref.dtype)


def encoder_forward(x, params, eps, latent_dim, *, block_rows=2048,
                    compute_dtype=jnp.bfloat16):
    """x: [B, input_dim] f32, eps: [B, latent_dim] f32 (standard normal)."""
    b, input_dim = x.shape
    (w1, b1), (w2, b2), (w3, b3), (w4, b4) = params

    # Pre-split the final layer columns (layout plumbing, outside the kernel).
    w4m, w4v = w4[:, :latent_dim], w4[:, latent_dim:]
    b4m, b4v = b4[:, :latent_dim], b4[:, latent_dim:]

    cd = jnp.dtype(compute_dtype)
    # One-time casts: weights stay VMEM-resident in compute_dtype (no per-step
    # VPU recast); x streams in compute_dtype (halves the dominant HBM stream
    # when bf16 — in a real pipeline this cast fuses into x's producer).
    # Biases stay f32: they are added to the f32 accumulator.
    x_cd = x.astype(cd)
    eps = eps.astype(jnp.float32)
    w1c, w2c, w3c, w4mc, w4vc = (w1.astype(cd), w2.astype(cd), w3.astype(cd),
                                 w4m.astype(cd), w4v.astype(cd))

    # Batch tile: either one full-extent block, or an aligned multiple of 16
    # sublanes (valid for both f32 and bf16 packing).  No padding: Pallas
    # handles the ragged final block.
    if b <= block_rows:
        tb = b
    else:
        tb = max(16, (block_rows // 16) * 16)
    grid = (pl.cdiv(b, tb),)

    def resident(a):  # weight / bias kept VMEM-resident across the grid
        return pl.BlockSpec(a.shape, lambda i: (0,) * a.ndim)

    in_specs = [
        pl.BlockSpec((tb, input_dim), lambda i: (i, 0)),     # x   (tiled)
        resident(w1c), resident(b1),
        resident(w2c), resident(b2),
        resident(w3c), resident(b3),
        resident(w4mc), resident(b4m),
        resident(w4vc), resident(b4v),
        pl.BlockSpec((tb, latent_dim), lambda i: (i, 0)),    # eps (tiled)
    ]
    out_specs = pl.BlockSpec((tb, latent_dim), lambda i: (i, 0))

    # Advisory cost estimate for XLA's scheduler.
    weight_bytes = sum(int(a.size) * a.dtype.itemsize
                       for a in (w1c, b1, w2c, b2, w3c, b3,
                                 w4mc, b4m, w4vc, b4v))
    flops_per_row = 2 * (input_dim * (input_dim // 2)
                         + (input_dim // 2) * (input_dim // 4)
                         + (input_dim // 4) * (input_dim // 8)
                         + (input_dim // 8) * (2 * latent_dim))
    cost = pl.CostEstimate(
        flops=int(b) * flops_per_row,
        transcendentals=int(b) * latent_dim,
        bytes_accessed=(int(b) * input_dim * cd.itemsize     # x stream
                        + 2 * int(b) * latent_dim * 4        # eps + out
                        + weight_bytes),
    )

    return pl.pallas_call(
        encoder_kernel,
        out_shape=jax.ShapeDtypeStruct((b, latent_dim), jnp.float32),
        grid=grid,
        in_specs=in_specs,
        out_specs=out_specs,
        compiler_params=pltpu.CompilerParams(
            dimension_semantics=("parallel",)),
        cost_estimate=cost,
    )(x_cd, w1c, b1, w2c, b2, w3c, b3, w4mc, b4m, w4vc, b4v, eps)


def init_params(key, input_dim, latent_dim):
    """Deterministic parameter init (PyTorch-Linear-like uniform)."""
    dims = [input_dim, input_dim // 2, input_dim // 4, input_dim // 8,
            latent_dim * 2]
    params = []
    for i in range(4):
        fan_in, fan_out = dims[i], dims[i + 1]
        key, kw, kb = jax.random.split(key, 3)
        bound = 1.0 / jnp.sqrt(fan_in)
        # stored as [in, out] (transposed vs. torch.nn.Linear.weight)
        w = jax.random.uniform(kw, (fan_in, fan_out), jnp.float32,
                               minval=-bound, maxval=bound)
        bvec = jax.random.uniform(kb, (1, fan_out), jnp.float32,
                                  minval=-bound, maxval=bound)
        params.append((w, bvec))
    return params


def reference_forward(x, params, eps, latent_dim):
    """Pure-JAX f32 reference for sanity checking."""
    h = x
    for i, (w, bvec) in enumerate(params):
        h = h @ w + bvec
        if i < 3:
            h = jnp.maximum(h, 0.0)
    mean, log_var = h[:, :latent_dim], h[:, latent_dim:]
    log_var = jnp.clip(log_var, -10.0, 10.0)
    std = jnp.exp(0.5 * log_var)
    return mean + std * eps


if __name__ == "__main__":
    INPUT_DIM = 128   # config.input_dim  (hidden dims: 64, 32, 16)
    LATENT_DIM = 8    # config.latent_dim (final Linear outputs 16 = 2*latent)
    BATCH = 100       # not a tile multiple -> exercises the ragged final block

    key = jax.random.PRNGKey(0)
    k_x, k_eps, k_params = jax.random.split(key, 3)

    x = jax.random.normal(k_x, (BATCH, INPUT_DIM), jnp.float32)
    eps = jax.random.normal(k_eps, (BATCH, LATENT_DIM), jnp.float32)
    params = init_params(k_params, INPUT_DIM, LATENT_DIM)

    ref = reference_forward(x, params, eps, LATENT_DIM)

    # 1) f32 MXU operands, small tile -> multi-step grid + ragged tail block;
    #    bit-tight vs. the f32 reference.
    out_f32 = encoder_forward(x, params, eps, LATENT_DIM,
                              block_rows=32, compute_dtype=jnp.float32)
    out_f32 = jax.block_until_ready(out_f32)
    assert out_f32.shape == (BATCH, LATENT_DIM)
    assert jnp.allclose(out_f32, ref, atol=1e-5, rtol=1e-5)

    # 2) Default fast path: bf16 MXU operands / streamed x, large row tile.
    #    Looser tolerance vs. the f32 reference (bf16 operand rounding).
    out_bf16 = encoder_forward(x, params, eps, LATENT_DIM)
    out_bf16 = jax.block_until_ready(out_bf16)
    assert out_bf16.shape == (BATCH, LATENT_DIM)
    assert jnp.allclose(out_bf16, ref, atol=5e-2, rtol=5e-2)

    print("KERNEL_OK")
</pallas_src>

<mosaic_0001>
module attributes {stable_mosaic.version = 11 : i64} {
  func.func @encoder_kernel(%arg0: i32, %arg1: memref<32x128xf32, #tpu.memory_space<vmem>>, %arg2: memref<128x64xf32, #tpu.memory_space<vmem>>, %arg3: memref<1x64xf32, #tpu.memory_space<vmem>>, %arg4: memref<64x32xf32, #tpu.memory_space<vmem>>, %arg5: memref<1x32xf32, #tpu.memory_space<vmem>>, %arg6: memref<32x16xf32, #tpu.memory_space<vmem>>, %arg7: memref<1x16xf32, #tpu.memory_space<vmem>>, %arg8: memref<16x8xf32, #tpu.memory_space<vmem>>, %arg9: memref<1x8xf32, #tpu.memory_space<vmem>>, %arg10: memref<16x8xf32, #tpu.memory_space<vmem>>, %arg11: memref<1x8xf32, #tpu.memory_space<vmem>>, %arg12: memref<32x8xf32, #tpu.memory_space<vmem>>, %arg13: memref<32x8xf32, #tpu.memory_space<vmem>>) attributes {dimension_semantics = [#tpu.dimension_semantics<parallel>], iteration_bounds = array<i64: 4>, scalar_prefetch = 0 : i64, scratch_operands = 0 : i64, tpu.core_type = #tpu.core_type<tc>, window_params = [{transform_indices = @transform_0, window_bounds = array<i64: 32, 128>}, {pipeline_mode = #tpu.pipeline_mode<synchronous>, transform_indices = @transform_1, window_bounds = array<i64: 128, 64>}, {pipeline_mode = #tpu.pipeline_mode<synchronous>, transform_indices = @transform_2, window_bounds = array<i64: 1, 64>}, {pipeline_mode = #tpu.pipeline_mode<synchronous>, transform_indices = @transform_3, window_bounds = array<i64: 64, 32>}, {pipeline_mode = #tpu.pipeline_mode<synchronous>, transform_indices = @transform_4, window_bounds = array<i64: 1, 32>}, {pipeline_mode = #tpu.pipeline_mode<synchronous>, transform_indices = @transform_5, window_bounds = array<i64: 32, 16>}, {pipeline_mode = #tpu.pipeline_mode<synchronous>, transform_indices = @transform_6, window_bounds = array<i64: 1, 16>}, {pipeline_mode = #tpu.pipeline_mode<synchronous>, transform_indices = @transform_7, window_bounds = array<i64: 16, 8>}, {pipeline_mode = #tpu.pipeline_mode<synchronous>, transform_indices = @transform_8, window_bounds = array<i64: 1, 8>}, {pipeline_mode = #tpu.pipeline_mode<synchronous>, transform_indices = @transform_9, window_bounds = array<i64: 16, 8>}, {pipeline_mode = #tpu.pipeline_mode<synchronous>, transform_indices = @transform_10, window_bounds = array<i64: 1, 8>}, {transform_indices = @transform_11, window_bounds = array<i64: 32, 8>}, {transform_indices = @transform_12, window_bounds = array<i64: 32, 8>}]} {
    %c0 = arith.constant 0 : index
    %c0_0 = arith.constant 0 : index
    %0 = vector.load %arg1[%c0, %c0_0] : memref<32x128xf32, #tpu.memory_space<vmem>>, vector<32x128xf32>
    %c0_1 = arith.constant 0 : index
    %c0_2 = arith.constant 0 : index
    %1 = vector.load %arg2[%c0_1, %c0_2] : memref<128x64xf32, #tpu.memory_space<vmem>>, vector<128x64xf32>
    %cst = arith.constant dense<0.000000e+00> : vector<32x64xf32>
    %2 = tpu.matmul %0, %1, %cst {dimension_numbers = #tpu.dot_dimension_numbers<[1], [0], [0], [1], [0, 0, 1, 1], [], []>} : vector<32x128xf32>, vector<128x64xf32>, vector<32x64xf32> -> vector<32x64xf32>
    %c0_3 = arith.constant 0 : index
    %c0_4 = arith.constant 0 : index
    %3 = vector.load %arg3[%c0_3, %c0_4] : memref<1x64xf32, #tpu.memory_space<vmem>>, vector<1x64xf32>
    %4 = vector.broadcast %3 : vector<1x64xf32> to vector<32x64xf32>
    %5 = arith.addf %2, %4 : vector<32x64xf32>
    %cst_5 = arith.constant 0.000000e+00 : f32
    %6 = vector.broadcast %cst_5 : f32 to vector<32x64xf32>
    %7 = arith.maximumf %5, %6 : vector<32x64xf32>
    %c0_6 = arith.constant 0 : index
    %c0_7 = arith.constant 0 : index
    %8 = vector.load %arg4[%c0_6, %c0_7] : memref<64x32xf32, #tpu.memory_space<vmem>>, vector<64x32xf32>
    %cst_8 = arith.constant dense<0.000000e+00> : vector<32x32xf32>
    %9 = tpu.matmul %7, %8, %cst_8 {dimension_numbers = #tpu.dot_dimension_numbers<[1], [0], [0], [1], [0, 0, 1, 1], [], []>} : vector<32x64xf32>, vector<64x32xf32>, vector<32x32xf32> -> vector<32x32xf32>
    %c0_9 = arith.constant 0 : index
    %c0_10 = arith.constant 0 : index
    %10 = vector.load %arg5[%c0_9, %c0_10] : memref<1x32xf32, #tpu.memory_space<vmem>>, vector<1x32xf32>
    %11 = vector.broadcast %10 : vector<1x32xf32> to vector<32x32xf32>
    %12 = arith.addf %9, %11 : vector<32x32xf32>
    %cst_11 = arith.constant 0.000000e+00 : f32
    %13 = vector.broadcast %cst_11 : f32 to vector<32x32xf32>
    %14 = arith.maximumf %12, %13 : vector<32x32xf32>
    %c0_12 = arith.constant 0 : index
    %c0_13 = arith.constant 0 : index
    %15 = vector.load %arg6[%c0_12, %c0_13] : memref<32x16xf32, #tpu.memory_space<vmem>>, vector<32x16xf32>
    %cst_14 = arith.constant dense<0.000000e+00> : vector<32x16xf32>
    %16 = tpu.matmul %14, %15, %cst_14 {dimension_numbers = #tpu.dot_dimension_numbers<[1], [0], [0], [1], [0, 0, 1, 1], [], []>} : vector<32x32xf32>, vector<32x16xf32>, vector<32x16xf32> -> vector<32x16xf32>
    %c0_15 = arith.constant 0 : index
    %c0_16 = arith.constant 0 : index
    %17 = vector.load %arg7[%c0_15, %c0_16] : memref<1x16xf32, #tpu.memory_space<vmem>>, vector<1x16xf32>
    %18 = vector.broadcast %17 : vector<1x16xf32> to vector<32x16xf32>
    %19 = arith.addf %16, %18 : vector<32x16xf32>
    %cst_17 = arith.constant 0.000000e+00 : f32
    %20 = vector.broadcast %cst_17 : f32 to vector<32x16xf32>
    %21 = arith.maximumf %19, %20 : vector<32x16xf32>
    %c0_18 = arith.constant 0 : index
    %c0_19 = arith.constant 0 : index
    %22 = vector.load %arg8[%c0_18, %c0_19] : memref<16x8xf32, #tpu.memory_space<vmem>>, vector<16x8xf32>
    %cst_20 = arith.constant dense<0.000000e+00> : vector<32x8xf32>
    %23 = tpu.matmul %21, %22, %cst_20 {dimension_numbers = #tpu.dot_dimension_numbers<[1], [0], [0], [1], [0, 0, 1, 1], [], []>} : vector<32x16xf32>, vector<16x8xf32>, vector<32x8xf32> -> vector<32x8xf32>
    %c0_21 = arith.constant 0 : index
    %c0_22 = arith.constant 0 : index
    %24 = vector.load %arg9[%c0_21, %c0_22] : memref<1x8xf32, #tpu.memory_space<vmem>>, vector<1x8xf32>
    %25 = vector.broadcast %24 : vector<1x8xf32> to vector<32x8xf32>
    %26 = arith.addf %23, %25 : vector<32x8xf32>
    %c0_23 = arith.constant 0 : index
    %c0_24 = arith.constant 0 : index
    %27 = vector.load %arg10[%c0_23, %c0_24] : memref<16x8xf32, #tpu.memory_space<vmem>>, vector<16x8xf32>
    %cst_25 = arith.constant dense<0.000000e+00> : vector<32x8xf32>
    %28 = tpu.matmul %21, %27, %cst_25 {dimension_numbers = #tpu.dot_dimension_numbers<[1], [0], [0], [1], [0, 0, 1, 1], [], []>} : vector<32x16xf32>, vector<16x8xf32>, vector<32x8xf32> -> vector<32x8xf32>
    %c0_26 = arith.constant 0 : index
    %c0_27 = arith.constant 0 : index
    %29 = vector.load %arg11[%c0_26, %c0_27] : memref<1x8xf32, #tpu.memory_space<vmem>>, vector<1x8xf32>
    %30 = vector.broadcast %29 : vector<1x8xf32> to vector<32x8xf32>
    %31 = arith.addf %28, %30 : vector<32x8xf32>
    %cst_28 = arith.constant -1.000000e+01 : f32
    %cst_29 = arith.constant 1.000000e+01 : f32
    %32 = vector.broadcast %cst_28 : f32 to vector<32x8xf32>
    %33 = arith.maximumf %32, %31 : vector<32x8xf32>
    %34 = vector.broadcast %cst_29 : f32 to vector<32x8xf32>
    %35 = arith.minimumf %34, %33 : vector<32x8xf32>
    %cst_30 = arith.constant 5.000000e-01 : f32
    %36 = vector.broadcast %cst_30 : f32 to vector<32x8xf32>
    %37 = arith.mulf %36, %35 : vector<32x8xf32>
    %38 = math.exp %37 : vector<32x8xf32>
    %c0_31 = arith.constant 0 : index
    %c0_32 = arith.constant 0 : index
    %39 = vector.load %arg12[%c0_31, %c0_32] : memref<32x8xf32, #tpu.memory_space<vmem>>, vector<32x8xf32>
    %40 = arith.mulf %38, %39 : vector<32x8xf32>
    %41 = arith.addf %26, %40 : vector<32x8xf32>
    %c0_33 = arith.constant 0 : index
    %c0_34 = arith.constant 0 : index
    %42 = vector.load %arg13[%c0_33, %c0_34] : memref<32x8xf32, #tpu.memory_space<vmem>>, vector<32x8xf32>
    tpu.vector_store %arg13[%c0_33, %c0_34], %41 {strides = array<i32>} : memref<32x8xf32, #tpu.memory_space<vmem>>, vector<32x8xf32>,
    return
  }
  func.func @transform_0(%arg0: i32) -> (i32, i32) {
    %c0_i32 = arith.constant 0 : i32
    %c0_i32_0 = arith.constant 0 : i32
    return %arg0, %c0_i32 : i32, i32
  }
  func.func @transform_1(%arg0: i32) -> (i32, i32) {
    %c0_i32 = arith.constant 0 : i32
    %c0_i32_0 = arith.constant 0 : i32
    %c0_i32_1 = arith.constant 0 : i32
    return %c0_i32, %c0_i32_0 : i32, i32
  }
  func.func @transform_2(%arg0: i32) -> (i32, i32) {
    %c0_i32 = arith.constant 0 : i32
    %c0_i32_0 = arith.constant 0 : i32
    %c0_i32_1 = arith.constant 0 : i32
    return %c0_i32, %c0_i32_0 : i32, i32
  }
  func.func @transform_3(%arg0: i32) -> (i32, i32) {
    %c0_i32 = arith.constant 0 : i32
    %c0_i32_0 = arith.constant 0 : i32
    %c0_i32_1 = arith.constant 0 : i32
    return %c0_i32, %c0_i32_0 : i32, i32
  }
  func.func @transform_4(%arg0: i32) -> (i32, i32) {
    %c0_i32 = arith.constant 0 : i32
    %c0_i32_0 = arith.constant 0 : i32
    %c0_i32_1 = arith.constant 0 : i32
    return %c0_i32, %c0_i32_0 : i32, i32
  }
  func.func @transform_5(%arg0: i32) -> (i32, i32) {
    %c0_i32 = arith.constant 0 : i32
    %c0_i32_0 = arith.constant 0 : i32
    %c0_i32_1 = arith.constant 0 : i32
    return %c0_i32, %c0_i32_0 : i32, i32
  }
  func.func @transform_6(%arg0: i32) -> (i32, i32) {
    %c0_i32 = arith.constant 0 : i32
    %c0_i32_0 = arith.constant 0 : i32
    %c0_i32_1 = arith.constant 0 : i32
    return %c0_i32, %c0_i32_0 : i32, i32
  }
  func.func @transform_7(%arg0: i32) -> (i32, i32) {
    %c0_i32 = arith.constant 0 : i32
    %c0_i32_0 = arith.constant 0 : i32
    %c0_i32_1 = arith.constant 0 : i32
    return %c0_i32, %c0_i32_0 : i32, i32
  }
  func.func @transform_8(%arg0: i32) -> (i32, i32) {
    %c0_i32 = arith.constant 0 : i32
    %c0_i32_0 = arith.constant 0 : i32
    %c0_i32_1 = arith.constant 0 : i32
    return %c0_i32, %c0_i32_0 : i32, i32
  }
  func.func @transform_9(%arg0: i32) -> (i32, i32) {
    %c0_i32 = arith.constant 0 : i32
    %c0_i32_0 = arith.constant 0 : i32
    %c0_i32_1 = arith.constant 0 : i32
    return %c0_i32, %c0_i32_0 : i32, i32
  }
  func.func @transform_10(%arg0: i32) -> (i32, i32) {
    %c0_i32 = arith.constant 0 : i32
    %c0_i32_0 = arith.constant 0 : i32
    %c0_i32_1 = arith.constant 0 : i32
    return %c0_i32, %c0_i32_0 : i32, i32
  }
  func.func @transform_11(%arg0: i32) -> (i32, i32) {
    %c0_i32 = arith.constant 0 : i32
    %c0_i32_0 = arith.constant 0 : i32
    return %arg0, %c0_i32 : i32, i32
  }
  func.func @transform_12(%arg0: i32) -> (i32, i32) {
    %c0_i32 = arith.constant 0 : i32
    %c0_i32_0 = arith.constant 0 : i32
    return %arg0, %c0_i32 : i32, i32
  }
}

</mosaic_0001>

<llo_original>
// kernel: tpu_custom_call.1
$region0: #{tpu_custom_call.1}
  #allocation0 [shape = 'u32[]', space=smem, size = 0x4, offset = 0x4, fixed_abs, tag = 'smem constant byte address 0x4 - core index']
  #allocation1 [shape = 'u32[144,128]{1,0:T(1,128)}', space=vmem, size = 0x12000, scoped, tag = 'internal scratch']
  %s0 = inlined_call_operand.vmem [shape: f32[100,128], index: 0, kind: input, shape index: {}]
  %s1 = inlined_call_operand.vmem [shape: f32[128,64], index: 1, kind: input, shape index: {}]
  %s2 = inlined_call_operand.vmem [shape: f32[1,64], index: 2, kind: input, shape index: {}]
  %s3 = inlined_call_operand.vmem [shape: f32[64,32], index: 3, kind: input, shape index: {}]
  %s4 = inlined_call_operand.vmem [shape: f32[1,32], index: 4, kind: input, shape index: {}]
  %s5 = inlined_call_operand.vmem [shape: f32[32,16], index: 5, kind: input, shape index: {}]
  %s6 = inlined_call_operand.vmem [shape: f32[1,16], index: 6, kind: input, shape index: {}]
  %s7 = inlined_call_operand.vmem [shape: f32[16,8], index: 7, kind: input, shape index: {}]
  %s8 = inlined_call_operand.vmem [shape: f32[1,8], index: 8, kind: input, shape index: {}]
  %s9 = inlined_call_operand.vmem [shape: f32[16,8], index: 9, kind: input, shape index: {}]
  %s10 = inlined_call_operand.vmem [shape: f32[1,8], index: 10, kind: input, shape index: {}]
  %s11 = inlined_call_operand.vmem [shape: f32[100,8], index: 11, kind: input, shape index: {}]
  %s12 = inlined_call_operand.vmem [shape: f32[100,8], index: 12, kind: output, shape index: {}]
  %s13 = sld [smem:[#allocation0]]
  $region129: #{tpu_custom_call.1} parent=0
    _
  %s15 = ssub.s32 1, %s13
  %s16 = scalar_select 0, %s15, %s13
  $region1: #{tpu_custom_call.1} parent=0
    #allocation2 [shape = 'u8[32768]{0}', space=vmem, size = 0x8000, scoped, tag = 'output window, operand 0']
    loop: start=0, step=1, limit=6
    $region2: #{tpu_custom_call.1} parent=1 // loop_pre_header
      _
    $region3: #{tpu_custom_call.1} parent=1 // loop_header
      %s18 = sphi 0, %s22
      %p19 = scmp.ge.s32.totalorder %s18, 6
      %s28 = sphi 0, %s30
      %s31 = sphi 0, %s28
      %s32 = sphi 0, %s31
      %s48 = sphi 0, %s32
      %s52 = sphi 0, %s52
      %s54 = sphi 0, %s52
      %s55 = sphi 0, %s54
      %s69 = sphi 0, %s55
      %s73 = sphi 0, %s73
      %s75 = sphi 0, %s73
      %s76 = sphi 0, %s75
      %s90 = sphi 0, %s76
      %s94 = sphi 0, %s94
      %s96 = sphi 0, %s94
      %s97 = sphi 0, %s96
      %s111 = sphi 0, %s97
      %s115 = sphi 0, %s115
      %s117 = sphi 0, %s115
      %s118 = sphi 0, %s117
      %s132 = sphi 0, %s118
      %s136 = sphi 0, %s136
      %s138 = sphi 0, %s136
      %s139 = sphi 0, %s138
      %s153 = sphi 0, %s139
      %s157 = sphi 0, %s157
      %s159 = sphi 0, %s157
      %s160 = sphi 0, %s159
      %s174 = sphi 0, %s160
      %s178 = sphi 0, %s178
      %s180 = sphi 0, %s178
      %s181 = sphi 0, %s180
      %s195 = sphi 0, %s181
      %s199 = sphi 0, %s199
      %s201 = sphi 0, %s199
      %s202 = sphi 0, %s201
      %s216 = sphi 0, %s202
      %s220 = sphi 0, %s220
      %s222 = sphi 0, %s220
      %s223 = sphi 0, %s222
      %s237 = sphi 0, %s223
      %s241 = sphi 0, %s241
      %s243 = sphi 0, %s241
      %s244 = sphi 0, %s243
      %s258 = sphi 0, %s244
      %s264 = sphi 0, %s266
      %s267 = sphi 0, %s264
      %s268 = sphi 0, %s267
      %s284 = sphi 0, %s268
      %s290 = sphi 0, %s292
      %s293 = sphi 0, %s290
      %s294 = sphi 0, %s293
      %s310 = sphi 0, %s294
    $region4: #{tpu_custom_call.1} parent=1 // loop_header_branch
      %21 = sbr.rel (%p19) target = $region8
    $region5: #{tpu_custom_call.1} parent=1 // loop_body
      %s23 = ssub.s32 %s18, 1
      %s24 = ssub.s32 %s18, 2
      %s25 = sadd.s32 %s18, 1
      %s26 = ssub.s32 %s18, %s25
      %p27 = scmp.eq.s32.totalorder %s26, 0
      %s29 = sadd.s32 %s28, 1
      %s30 = scalar_select %p27, %s28, %s29
      %p33 = pneg %p27
      %p34 = scmp.eq.s32.totalorder %s18, 3
      %p35 = por %p33, %p34
      %p36 = scmp.ne.s32.totalorder %s28, %s31
      %p37 = scmp.eq.s32.totalorder %s18, 0
      %p38 = por %p36, %p37
      %p39 = scmp.ne.s32.totalorder %s28, %s31
      %p40 = scmp.eq.s32.totalorder %s23, 3
      %p41 = por %p39, %p40
      %p42 = scmp.ne.s32.totalorder %s31, %s32
      %p43 = scmp.eq.s32.totalorder %s23, 0
      %p44 = por %p42, %p43
      %p45 = scmp.ne.s32.totalorder %s31, %s32
      %p46 = scmp.eq.s32.totalorder %s24, 3
      %p47 = por %p45, %p46
      %p49 = scmp.ne.s32.totalorder %s32, %s48
      %p50 = scmp.eq.s32.totalorder %s24, 0
      %p51 = por %p49, %p50
      %s53 = sadd.s32 %s52, 1
      %p56 = scmp.eq.s32.totalorder %s18, 3
      %p57 = scmp.ne.s32.totalorder %s52, %s54
      %p58 = scmp.eq.s32.totalorder %s18, 0
      %p59 = por %p57, %p58
      %p60 = scmp.ne.s32.totalorder %s52, %s54
      %p61 = scmp.eq.s32.totalorder %s23, 3
      %p62 = por %p60, %p61
      %p63 = scmp.ne.s32.totalorder %s54, %s55
      %p64 = scmp.eq.s32.totalorder %s23, 0
      %p65 = por %p63, %p64
      %p66 = scmp.ne.s32.totalorder %s54, %s55
      %p67 = scmp.eq.s32.totalorder %s24, 3
      %p68 = por %p66, %p67
      %p70 = scmp.ne.s32.totalorder %s55, %s69
      %p71 = scmp.eq.s32.totalorder %s24, 0
      %p72 = por %p70, %p71
      %s74 = sadd.s32 %s73, 1
      %p77 = scmp.eq.s32.totalorder %s18, 3
      %p78 = scmp.ne.s32.totalorder %s73, %s75
      %p79 = scmp.eq.s32.totalorder %s18, 0
      %p80 = por %p78, %p79
      %p81 = scmp.ne.s32.totalorder %s73, %s75
      %p82 = scmp.eq.s32.totalorder %s23, 3
      %p83 = por %p81, %p82
      %p84 = scmp.ne.s32.totalorder %s75, %s76
      %p85 = scmp.eq.s32.totalorder %s23, 0
      %p86 = por %p84, %p85
      %p87 = scmp.ne.s32.totalorder %s75, %s76
      %p88 = scmp.eq.s32.totalorder %s24, 3
      %p89 = por %p87, %p88
      %p91 = scmp.ne.s32.totalorder %s76, %s90
      %p92 = scmp.eq.s32.totalorder %s24, 0
      %p93 = por %p91, %p92
      %s95 = sadd.s32 %s94, 1
      %p98 = scmp.eq.s32.totalorder %s18, 3
      %p99 = scmp.ne.s32.totalorder %s94, %s96
      %p100 = scmp.eq.s32.totalorder %s18, 0
      %p101 = por %p99, %p100
      %p102 = scmp.ne.s32.totalorder %s94, %s96
      %p103 = scmp.eq.s32.totalorder %s23, 3
      %p104 = por %p102, %p103
      %p105 = scmp.ne.s32.totalorder %s96, %s97
      %p106 = scmp.eq.s32.totalorder %s23, 0
      %p107 = por %p105, %p106
      %p108 = scmp.ne.s32.totalorder %s96, %s97
      %p109 = scmp.eq.s32.totalorder %s24, 3
      %p110 = por %p108, %p109
      %p112 = scmp.ne.s32.totalorder %s97, %s111
      %p113 = scmp.eq.s32.totalorder %s24, 0
      %p114 = por %p112, %p113
      %s116 = sadd.s32 %s115, 1
      %p119 = scmp.eq.s32.totalorder %s18, 3
      %p120 = scmp.ne.s32.totalorder %s115, %s117
      %p121 = scmp.eq.s32.totalorder %s18, 0
      %p122 = por %p120, %p121
      %p123 = scmp.ne.s32.totalorder %s115, %s117
      %p124 = scmp.eq.s32.totalorder %s23, 3
      %p125 = por %p123, %p124
      %p126 = scmp.ne.s32.totalorder %s117, %s118
      %p127 = scmp.eq.s32.totalorder %s23, 0
      %p128 = por %p126, %p127
      %p129 = scmp.ne.s32.totalorder %s117, %s118
      %p130 = scmp.eq.s32.totalorder %s24, 3
      %p131 = por %p129, %p130
      %p133 = scmp.ne.s32.totalorder %s118, %s132
      %p134 = scmp.eq.s32.totalorder %s24, 0
      %p135 = por %p133, %p134
      %s137 = sadd.s32 %s136, 1
      %p140 = scmp.eq.s32.totalorder %s18, 3
      %p141 = scmp.ne.s32.totalorder %s136, %s138
      %p142 = scmp.eq.s32.totalorder %s18, 0
      %p143 = por %p141, %p142
      %p144 = scmp.ne.s32.totalorder %s136, %s138
      %p145 = scmp.eq.s32.totalorder %s23, 3
      %p146 = por %p144, %p145
      %p147 = scmp.ne.s32.totalorder %s138, %s139
      %p148 = scmp.eq.s32.totalorder %s23, 0
      %p149 = por %p147, %p148
      %p150 = scmp.ne.s32.totalorder %s138, %s139
      %p151 = scmp.eq.s32.totalorder %s24, 3
      %p152 = por %p150, %p151
      %p154 = scmp.ne.s32.totalorder %s139, %s153
      %p155 = scmp.eq.s32.totalorder %s24, 0
      %p156 = por %p154, %p155
      %s158 = sadd.s32 %s157, 1
      %p161 = scmp.eq.s32.totalorder %s18, 3
      %p162 = scmp.ne.s32.totalorder %s157, %s159
      %p163 = scmp.eq.s32.totalorder %s18, 0
      %p164 = por %p162, %p163
      %p165 = scmp.ne.s32.totalorder %s157, %s159
      %p166 = scmp.eq.s32.totalorder %s23, 3
      %p167 = por %p165, %p166
      %p168 = scmp.ne.s32.totalorder %s159, %s160
      %p169 = scmp.eq.s32.totalorder %s23, 0
      %p170 = por %p168, %p169
      %p171 = scmp.ne.s32.totalorder %s159, %s160
      %p172 = scmp.eq.s32.totalorder %s24, 3
      %p173 = por %p171, %p172
      %p175 = scmp.ne.s32.totalorder %s160, %s174
      %p176 = scmp.eq.s32.totalorder %s24, 0
      %p177 = por %p175, %p176
      %s179 = sadd.s32 %s178, 1
      %p182 = scmp.eq.s32.totalorder %s18, 3
      %p183 = scmp.ne.s32.totalorder %s178, %s180
      %p184 = scmp.eq.s32.totalorder %s18, 0
      %p185 = por %p183, %p184
      %p186 = scmp.ne.s32.totalorder %s178, %s180
      %p187 = scmp.eq.s32.totalorder %s23, 3
      %p188 = por %p186, %p187
      %p189 = scmp.ne.s32.totalorder %s180, %s181
      %p190 = scmp.eq.s32.totalorder %s23, 0
      %p191 = por %p189, %p190
      %p192 = scmp.ne.s32.totalorder %s180, %s181
      %p193 = scmp.eq.s32.totalorder %s24, 3
      %p194 = por %p192, %p193
      %p196 = scmp.ne.s32.totalorder %s181, %s195
      %p197 = scmp.eq.s32.totalorder %s24, 0
      %p198 = por %p196, %p197
      %s200 = sadd.s32 %s199, 1
      %p203 = scmp.eq.s32.totalorder %s18, 3
      %p204 = scmp.ne.s32.totalorder %s199, %s201
      %p205 = scmp.eq.s32.totalorder %s18, 0
      %p206 = por %p204, %p205
      %p207 = scmp.ne.s32.totalorder %s199, %s201
      %p208 = scmp.eq.s32.totalorder %s23, 3
      %p209 = por %p207, %p208
      %p210 = scmp.ne.s32.totalorder %s201, %s202
      %p211 = scmp.eq.s32.totalorder %s23, 0
      %p212 = por %p210, %p211
      %p213 = scmp.ne.s32.totalorder %s201, %s202
      %p214 = scmp.eq.s32.totalorder %s24, 3
      %p215 = por %p213, %p214
      %p217 = scmp.ne.s32.totalorder %s202, %s216
      %p218 = scmp.eq.s32.totalorder %s24, 0
      %p219 = por %p217, %p218
      %s221 = sadd.s32 %s220, 1
      %p224 = scmp.eq.s32.totalorder %s18, 3
      %p225 = scmp.ne.s32.totalorder %s220, %s222
      %p226 = scmp.eq.s32.totalorder %s18, 0
      %p227 = por %p225, %p226
      %p228 = scmp.ne.s32.totalorder %s220, %s222
      %p229 = scmp.eq.s32.totalorder %s23, 3
      %p230 = por %p228, %p229
      %p231 = scmp.ne.s32.totalorder %s222, %s223
      %p232 = scmp.eq.s32.totalorder %s23, 0
      %p233 = por %p231, %p232
      %p234 = scmp.ne.s32.totalorder %s222, %s223
      %p235 = scmp.eq.s32.totalorder %s24, 3
      %p236 = por %p234, %p235
      %p238 = scmp.ne.s32.totalorder %s223, %s237
      %p239 = scmp.eq.s32.totalorder %s24, 0
      %p240 = por %p238, %p239
      %s242 = sadd.s32 %s241, 1
      %p245 = scmp.eq.s32.totalorder %s18, 3
      %p246 = scmp.ne.s32.totalorder %s241, %s243
      %p247 = scmp.eq.s32.totalorder %s18, 0
      %p248 = por %p246, %p247
      %p249 = scmp.ne.s32.totalorder %s241, %s243
      %p250 = scmp.eq.s32.totalorder %s23, 3
      %p251 = por %p249, %p250
      %p252 = scmp.ne.s32.totalorder %s243, %s244
      %p253 = scmp.eq.s32.totalorder %s23, 0
      %p254 = por %p252, %p253
      %p255 = scmp.ne.s32.totalorder %s243, %s244
      %p256 = scmp.eq.s32.totalorder %s24, 3
      %p257 = por %p255, %p256
      %p259 = scmp.ne.s32.totalorder %s244, %s258
      %p260 = scmp.eq.s32.totalorder %s24, 0
      %p261 = por %p259, %p260
      %s262 = ssub.s32 %s18, %s25
      %p263 = scmp.eq.s32.totalorder %s262, 0
      %s265 = sadd.s32 %s264, 1
      %s266 = scalar_select %p263, %s264, %s265
      %p269 = pneg %p263
      %p270 = scmp.eq.s32.totalorder %s18, 3
      %p271 = por %p269, %p270
      %p272 = scmp.ne.s32.totalorder %s264, %s267
      %p273 = scmp.eq.s32.totalorder %s18, 0
      %p274 = por %p272, %p273
      %p275 = scmp.ne.s32.totalorder %s264, %s267
      %p276 = scmp.eq.s32.totalorder %s23, 3
      %p277 = por %p275, %p276
      %p278 = scmp.ne.s32.totalorder %s267, %s268
      %p279 = scmp.eq.s32.totalorder %s23, 0
      %p280 = por %p278, %p279
      %p281 = scmp.ne.s32.totalorder %s267, %s268
      %p282 = scmp.eq.s32.totalorder %s24, 3
      %p283 = por %p281, %p282
      %p285 = scmp.ne.s32.totalorder %s268, %s284
      %p286 = scmp.eq.s32.totalorder %s24, 0
      %p287 = por %p285, %p286
      %s288 = ssub.s32 %s18, %s25
      %p289 = scmp.eq.s32.totalorder %s288, 0
      %s291 = sadd.s32 %s290, 1
      %s292 = scalar_select %p289, %s290, %s291
      %p295 = pneg %p289
      %p296 = scmp.eq.s32.totalorder %s18, 3
      %p297 = por %p295, %p296
      %p298 = scmp.ne.s32.totalorder %s290, %s293
      %p299 = scmp.eq.s32.totalorder %s18, 0
      %p300 = por %p298, %p299
      %p301 = scmp.ne.s32.totalorder %s290, %s293
      %p302 = scmp.eq.s32.totalorder %s23, 3
      %p303 = por %p301, %p302
      %p304 = scmp.ne.s32.totalorder %s293, %s294
      %p305 = scmp.eq.s32.totalorder %s23, 0
      %p306 = por %p304, %p305
      %p307 = scmp.ne.s32.totalorder %s293, %s294
      %p308 = scmp.eq.s32.totalorder %s24, 3
      %p309 = por %p307, %p308
      %p311 = scmp.ne.s32.totalorder %s294, %s310
      %p312 = scmp.eq.s32.totalorder %s24, 0
      %p313 = por %p311, %p312
      %p314 = scmp.le.s32.totalorder 1, %s18
      %p315 = scmp.lt.s32.totalorder %s18, 5
      %p316 = pnand %p314, %p315
      %p317 = pneg %p316
      // Predicated region
      $region9: #{tpu_custom_call.1} parent=5 // pred_check
        _
      $region10: #{tpu_custom_call.1} parent=5 // pred_check_branch
        %319 = sbr.rel (%p316) target = $region12
      $region11: #{tpu_custom_call.1} parent=5 // pred_region
        %s320 = ssub.s32 %s18, 1
        // Predicated region
        $region13: #{tpu_custom_call.1} parent=11 // pred_check
          %p321 = pneg %p65
        $region14: #{tpu_custom_call.1} parent=11 // pred_check_branch
          %323 = sbr.rel (%p321) target = $region16
        $region15: #{tpu_custom_call.1} parent=11 // pred_region
          _
        $region16: #{tpu_custom_call.1} parent=11 // pred_fallthru
          _
        // Predicated region
        $region17: #{tpu_custom_call.1} parent=11 // pred_check
          %p324 = pneg %p86
        $region18: #{tpu_custom_call.1} parent=11 // pred_check_branch
          %326 = sbr.rel (%p324) target = $region20
        $region19: #{tpu_custom_call.1} parent=11 // pred_region
          _
        $region20: #{tpu_custom_call.1} parent=11 // pred_fallthru
          _
        // Predicated region
        $region21: #{tpu_custom_call.1} parent=11 // pred_check
          %p327 = pneg %p107
        $region22: #{tpu_custom_call.1} parent=11 // pred_check_branch
          %329 = sbr.rel (%p327) target = $region24
        $region23: #{tpu_custom_call.1} parent=11 // pred_region
          _
        $region24: #{tpu_custom_call.1} parent=11 // pred_fallthru
          _
        // Predicated region
        $region25: #{tpu_custom_call.1} parent=11 // pred_check
          %p330 = pneg %p128
        $region26: #{tpu_custom_call.1} parent=11 // pred_check_branch
          %332 = sbr.rel (%p330) target = $region28
        $region27: #{tpu_custom_call.1} parent=11 // pred_region
          _
        $region28: #{tpu_custom_call.1} parent=11 // pred_fallthru
          _
        // Predicated region
        $region29: #{tpu_custom_call.1} parent=11 // pred_check
          %p333 = pneg %p149
        $region30: #{tpu_custom_call.1} parent=11 // pred_check_branch
          %335 = sbr.rel (%p333) target = $region32
        $region31: #{tpu_custom_call.1} parent=11 // pred_region
          _
        $region32: #{tpu_custom_call.1} parent=11 // pred_fallthru
          _
        // Predicated region
        $region33: #{tpu_custom_call.1} parent=11 // pred_check
          %p336 = pneg %p170
        $region34: #{tpu_custom_call.1} parent=11 // pred_check_branch
          %338 = sbr.rel (%p336) target = $region36
        $region35: #{tpu_custom_call.1} parent=11 // pred_region
          _
        $region36: #{tpu_custom_call.1} parent=11 // pred_fallthru
          _
        // Predicated region
        $region37: #{tpu_custom_call.1} parent=11 // pred_check
          %p339 = pneg %p191
        $region38: #{tpu_custom_call.1} parent=11 // pred_check_branch
          %341 = sbr.rel (%p339) target = $region40
        $region39: #{tpu_custom_call.1} parent=11 // pred_region
          _
        $region40: #{tpu_custom_call.1} parent=11 // pred_fallthru
          _
        // Predicated region
        $region41: #{tpu_custom_call.1} parent=11 // pred_check
          %p342 = pneg %p212
        $region42: #{tpu_custom_call.1} parent=11 // pred_check_branch
          %344 = sbr.rel (%p342) target = $region44
        $region43: #{tpu_custom_call.1} parent=11 // pred_region
          _
        $region44: #{tpu_custom_call.1} parent=11 // pred_fallthru
          _
        // Predicated region
        $region45: #{tpu_custom_call.1} parent=11 // pred_check
          %p345 = pneg %p233
        $region46: #{tpu_custom_call.1} parent=11 // pred_check_branch
          %347 = sbr.rel (%p345) target = $region48
        $region47: #{tpu_custom_call.1} parent=11 // pred_region
          _
        $region48: #{tpu_custom_call.1} parent=11 // pred_fallthru
          _
        // Predicated region
        $region49: #{tpu_custom_call.1} parent=11 // pred_check
          %p348 = pneg %p254
        $region50: #{tpu_custom_call.1} parent=11 // pred_check_branch
          %350 = sbr.rel (%p348) target = $region52
        $region51: #{tpu_custom_call.1} parent=11 // pred_region
          _
        $region52: #{tpu_custom_call.1} parent=11 // pred_fallthru
          _
      $region12: #{tpu_custom_call.1} parent=5 // pred_fallthru
        _
      %p351 = scmp.lt.s32.totalorder %s18, 4
      // Predicated region
      $region53: #{tpu_custom_call.1} parent=5 // pred_check
        %p352 = pneg %p351
      $region54: #{tpu_custom_call.1} parent=5 // pred_check_branch
        %354 = sbr.rel (%p352) target = $region56
      $region55: #{tpu_custom_call.1} parent=5 // pred_region
        // Predicated region
        $region57: #{tpu_custom_call.1} parent=55 // pred_check
          %p355 = pneg %p38
        $region58: #{tpu_custom_call.1} parent=55 // pred_check_branch
          %357 = sbr.rel (%p355) target = $region60
        $region59: #{tpu_custom_call.1} parent=55 // pred_region
          %s358 = smul.u32 4, %s18
          %s359 = ssub.s32 13, %s358
          %p360 = scmp.lt.s32.totalorder %s359, 4
          %s361 = scalar_select %p360, %s359, 4
          %s362 = smul.u32 128, %s361
          %p363 = scmp.lt.s32.totalorder %s358, 12
          %s364 = scalar_select %p363, %s358, 12
          %s365 = smul.addr %s364, 8
          %s366 = scalar_lea.vmem %s0, %s365
          %s367 = smul.u32 4, %s18
          %s368 = ssub.s32 13, %s367
          %p369 = scmp.lt.s32.totalorder %s368, 4
          %s370 = scalar_select %p369, %s368, 4
          %s371 = smul.u32 128, %s370
        $region60: #{tpu_custom_call.1} parent=55 // pred_fallthru
          _
        // Predicated region
        $region61: #{tpu_custom_call.1} parent=55 // pred_check
          %p372 = pneg %p274
        $region62: #{tpu_custom_call.1} parent=55 // pred_check_branch
          %374 = sbr.rel (%p372) target = $region64
        $region63: #{tpu_custom_call.1} parent=55 // pred_region
          %s375 = smul.u32 4, %s18
          %s376 = ssub.s32 13, %s375
          %p377 = scmp.lt.s32.totalorder %s376, 4
          %s378 = scalar_select %p377, %s376, 4
          %s379 = smul.u32 128, %s378
          %p380 = scmp.lt.s32.totalorder %s375, 12
          %s381 = scalar_select %p380, %s375, 12
          %s382 = smul.addr %s381, 8
          %s383 = scalar_lea.vmem %s11, %s382
          %s384 = smul.u32 4, %s18
          %s385 = ssub.s32 13, %s384
          %p386 = scmp.lt.s32.totalorder %s385, 4
          %s387 = scalar_select %p386, %s385, 4
          %s388 = smul.u32 128, %s387
        $region64: #{tpu_custom_call.1} parent=55 // pred_fallthru
          _
      $region56: #{tpu_custom_call.1} parent=5 // pred_fallthru
        _
      %p389 = scmp.le.s32.totalorder 1, %s18
      %p390 = scmp.lt.s32.totalorder %s18, 5
      %p391 = pnand %p389, %p390
      %p392 = pneg %p391
      // Predicated region
      $region65: #{tpu_custom_call.1} parent=5 // pred_check
        _
      $region66: #{tpu_custom_call.1} parent=5 // pred_check_branch
        %394 = sbr.rel (%p391) target = $region68
      $region67: #{tpu_custom_call.1} parent=5 // pred_region
        %s395 = ssub.s32 %s18, 1
        %s396 = smul.u32 4, %s23
        %s397 = ssub.s32 13, %s396
        %p398 = scmp.lt.s32.totalorder %s397, 4
        %s399 = scalar_select %p398, %s397, 4
        %s400 = smul.u32 128, %s399
        %p401 = scmp.lt.s32.totalorder %s396, 12
        %s402 = scalar_select %p401, %s396, 12
        %s403 = smul.addr %s402, 8
        %s404 = scalar_lea.vmem %s0, %s403
        %p405 = pneg %p44
        %p406 = pneg %p41
        %p407 = pneg %p65
        %p408 = pneg %p62
        %p409 = pneg %p86
        %p410 = pneg %p83
        %p411 = pneg %p107
        %p412 = pneg %p104
        %p413 = pneg %p128
        %p414 = pneg %p125
        %p415 = pneg %p149
        %p416 = pneg %p146
        %p417 = pneg %p170
        %p418 = pneg %p167
        %p419 = pneg %p191
        %p420 = pneg %p188
        %p421 = pneg %p212
        %p422 = pneg %p209
        %p423 = pneg %p233
        %p424 = pneg %p230
        %p425 = pneg %p254
        %p426 = pneg %p251
        %s427 = smul.u32 4, %s23
        %s428 = ssub.s32 13, %s427
        %p429 = scmp.lt.s32.totalorder %s428, 4
        %s430 = scalar_select %p429, %s428, 4
        %s431 = smul.u32 128, %s430
        %p432 = scmp.lt.s32.totalorder %s427, 12
        %s433 = scalar_select %p432, %s427, 12
        %s434 = smul.addr %s433, 8
        %s435 = scalar_lea.vmem %s11, %s434
        %p436 = pneg %p280
        %p437 = pneg %p277
        %p438 = pneg %p306
        %p439 = pneg %p303
        %s440 = sand.u32 %s293, 1
        %s441 = sand.u32 %s293, 1
        %s442 = smul.addr %s441, 32
        %s443 = scalar_lea.vmem [#allocation2], %s442
        %s444 = smul.u32 4, %s23
        %s445 = ssub.s32 13, %s444
        %p446 = scmp.lt.s32.totalorder %s445, 4
        %s447 = scalar_select %p446, %s445, 4
        %s448 = smul.u32 128, %s447
        %p449 = scmp.lt.s32.totalorder %s444, 12
        %s450 = scalar_select %p449, %s444, 12
        %s451 = smul.addr %s450, 8
        %s452 = scalar_lea.vmem %s0, %s451
        %s453 = smul.u32 4, %s23
        %s454 = ssub.s32 13, %s453
        %p455 = scmp.lt.s32.totalorder %s454, 4
        %s456 = scalar_select %p455, %s454, 4
        %s457 = smul.u32 128, %s456
        %s458 = smul.u32 4, %s23
        %s459 = ssub.s32 13, %s458
        %p460 = scmp.lt.s32.totalorder %s459, 4
        %s461 = scalar_select %p460, %s459, 4
        %s462 = smul.u32 128, %s461
        %p463 = scmp.lt.s32.totalorder %s458, 12
        %s464 = scalar_select %p463, %s458, 12
        %s465 = smul.addr %s464, 8
        %s466 = scalar_lea.vmem %s11, %s465
        %s467 = smul.u32 4, %s23
        %s468 = ssub.s32 13, %s467
        %p469 = scmp.lt.s32.totalorder %s468, 4
        %s470 = scalar_select %p469, %s468, 4
        %s471 = smul.u32 128, %s470
        %s472 = smul.u32 4, %s23
        %s473 = ssub.s32 13, %s472
        %p474 = scmp.lt.s32.totalorder %s473, 4
        %s475 = scalar_select %p474, %s473, 4
        %s476 = smul.u32 128, %s475
        %v477 = vld [vmem:[%s452] sm:$0xff]
        %v478 = vld [vmem:[%s452 + $0x8] sm:$0xff]
        %v479 = vld [vmem:[%s452 + $0x10] sm:$0xff]
        %v480 = vld [vmem:[%s452 + $0x18] sm:$0xff]
        %v481 = vld [vmem:[%s1] sm:$0xff]
        %v482 = vld [vmem:[%s1 + $0x8] sm:$0xff]
        %v483 = vld [vmem:[%s1 + $0x10] sm:$0xff]
        %v484 = vld [vmem:[%s1 + $0x18] sm:$0xff]
        %v485 = vld [vmem:[%s1 + $0x20] sm:$0xff]
        %v486 = vld [vmem:[%s1 + $0x28] sm:$0xff]
        %v487 = vld [vmem:[%s1 + $0x30] sm:$0xff]
        %v488 = vld [vmem:[%s1 + $0x38] sm:$0xff]
        %v489 = vld [vmem:[%s1 + $0x40] sm:$0xff]
        %v490 = vld [vmem:[%s1 + $0x48] sm:$0xff]
        %v491 = vld [vmem:[%s1 + $0x50] sm:$0xff]
        %v492 = vld [vmem:[%s1 + $0x58] sm:$0xff]
        %v493 = vld [vmem:[%s1 + $0x60] sm:$0xff]
        %v494 = vld [vmem:[%s1 + $0x68] sm:$0xff]
        %v495 = vld [vmem:[%s1 + $0x70] sm:$0xff]
        %v496 = vld [vmem:[%s1 + $0x78] sm:$0xff]
        %v497 = vld [vmem:[%s2] sm:$0x1]
        %v499 = vlaneseq
        %v500 = vshrl.u32 %v499, 7
        %v501 = vsub.s32 0, %v500
        %v502 = vrot.slane %v497, %v501
        %504 = vmatprep.subr.mxu0 0.0
        %505 = vmatpush1.msra.mxu0 %v496
        %506 = vmatprep.subr.mxu0 0.0
        %507 = vmatpush1.msra.mxu0 %v495
        %508 = vmatprep.subr.mxu0 0.0
        %509 = vmatpush1.msra.mxu0 %v494
        %510 = vmatprep.subr.mxu0 0.0
        %511 = vmatpush1.msra.mxu0 %v493
        %512 = vmatprep.subr.mxu0 0.0
        %513 = vmatpush1.msra.mxu0 %v492
        %514 = vmatprep.subr.mxu0 0.0
        %515 = vmatpush1.msra.mxu0 %v491
        %516 = vmatprep.subr.mxu0 0.0
        %517 = vmatpush1.msra.mxu0 %v490
        %518 = vmatprep.subr.mxu0 0.0
        %519 = vmatpush1.msra.mxu0 %v489
        %520 = vmatprep.subr.mxu0 0.0
        %521 = vmatpush1.msra.mxu0 %v488
        %522 = vmatprep.subr.mxu0 0.0
        %523 = vmatpush1.msra.mxu0 %v487
        %524 = vmatprep.subr.mxu0 0.0
        %525 = vmatpush1.msra.mxu0 %v486
        %526 = vmatprep.subr.mxu0 0.0
        %527 = vmatpush1.msra.mxu0 %v485
        %528 = vmatprep.subr.mxu0 0.0
        %529 = vmatpush1.msra.mxu0 %v484
        %530 = vmatprep.subr.mxu0 0.0
        %531 = vmatpush1.msra.mxu0 %v483
        %532 = vmatprep.subr.mxu0 0.0
        %533 = vmatpush1.msra.mxu0 %v482
        %534 = vmatprep.subr.mxu0 0.0
        %535 = vmatpush1.msra.mxu0 %v481
        %536 = vmatprep.subr.mxu0 0.0
        %537 = vmatpush2.msra.mxu0 0.0
        %538 = vmatprep.subr.mxu0 0.0
        %539 = vmatpush2.msra.mxu0 0.0
        %540 = vmatprep.subr.mxu0 0.0
        %541 = vmatpush2.msra.mxu0 0.0
        %542 = vmatprep.subr.mxu0 0.0
        %543 = vmatpush2.msra.mxu0 0.0
        %544 = vmatprep.subr.mxu0 0.0
        %545 = vmatpush2.msra.mxu0 0.0
        %546 = vmatprep.subr.mxu0 0.0
        %547 = vmatpush2.msra.mxu0 0.0
        %548 = vmatprep.subr.mxu0 0.0
        %549 = vmatpush2.msra.mxu0 0.0
        %550 = vmatprep.subr.mxu0 0.0
        %551 = vmatpush2.msra.mxu0 0.0
        %552 = vmatprep.subr.mxu0 0.0
        %553 = vmatpush2.msra.mxu0 0.0
        %554 = vmatprep.subr.mxu0 0.0
        %555 = vmatpush2.msra.mxu0 0.0
        %556 = vmatprep.subr.mxu0 0.0
        %557 = vmatpush2.msra.mxu0 0.0
        %558 = vmatprep.subr.mxu0 0.0
        %559 = vmatpush2.msra.mxu0 0.0
        %560 = vmatprep.subr.mxu0 0.0
        %561 = vmatpush2.msra.mxu0 0.0
        %562 = vmatprep.subr.mxu0 0.0
        %563 = vmatpush2.msra.mxu0 0.0
        %564 = vmatprep.subr.mxu0 0.0
        %565 = vmatpush2.msra.mxu0 0.0
        %566 = vmatprep.subr.mxu0 0.0
        %567 = vmatpush2.msra.mxu0 0.0
        %568 = vmatprep.mubr.f32.mxu0 0.0
        %569 = vmatmul.mubr.f32.gmra.mxu0 %v477
        %v570 = vpop.f32.mrf.mxu0
        %v571 = vadd.f32 %v502, %v570
        %v572 = vpop.f32.mrf.mxu0
        %573 = vmatprep.mubr.f32.mxu0 0.0
        %574 = vmatmul.mubr.f32.gmra.mxu0 %v478
        %v575 = vpop.f32.mrf.mxu0
        %v576 = vadd.f32 %v502, %v575
        %v577 = vpop.f32.mrf.mxu0
        %578 = vmatprep.mubr.f32.mxu0 0.0
        %579 = vmatmul.mubr.f32.gmra.mxu0 %v479
        %v580 = vpop.f32.mrf.mxu0
        %v581 = vadd.f32 %v502, %v580
        %v582 = vpop.f32.mrf.mxu0
        %583 = vmatprep.mubr.f32.mxu0 0.0
        %584 = vmatmul.mubr.f32.gmra.mxu0 %v480
        %v585 = vpop.f32.mrf.mxu0
        %v586 = vadd.f32 %v502, %v585
        %v587 = vpop.f32.mrf.mxu0
        %588 = vdwg.mxu0
        %v589 = vmax.f32 %v571, 0.0
        %v590 = vmax.f32 %v576, 0.0
        %v591 = vmax.f32 %v581, 0.0
        %v592 = vmax.f32 %v586, 0.0
        %v593 = vld [vmem:[%s3] sm:$0xff]
        %v594 = vld [vmem:[%s3 + $0x8] sm:$0xff]
        %v595 = vld [vmem:[%s3 + $0x10] sm:$0xff]
        %v596 = vld [vmem:[%s3 + $0x18] sm:$0xff]
        %v597 = vld [vmem:[%s3 + $0x20] sm:$0xff]
        %v598 = vld [vmem:[%s3 + $0x28] sm:$0xff]
        %v599 = vld [vmem:[%s3 + $0x30] sm:$0xff]
        %v600 = vld [vmem:[%s3 + $0x38] sm:$0xff]
        %v601 = vld [vmem:[%s4] sm:$0x1]
        %v603 = vlaneseq
        %v604 = vshrl.u32 %v603, 7
        %v605 = vsub.s32 0, %v604
        %v606 = vrot.slane %v601, %v605
        %vm608 = vcmask 523264
        %v610 = vsel %vm608, %v589, 0
        %v613 = vsel %vm608, %v590, 0
        %v616 = vsel %vm608, %v591, 0
        %v619 = vsel %vm608, %v592, 0
        %621 = vmatprep.subr.mxu0 0.0
        %622 = vmatpush1.msra.mxu0 0.0
        %623 = vmatprep.subr.mxu0 0.0
        %624 = vmatpush1.msra.mxu0 0.0
        %625 = vmatprep.subr.mxu0 0.0
        %626 = vmatpush1.msra.mxu0 0.0
        %627 = vmatprep.subr.mxu0 0.0
        %628 = vmatpush1.msra.mxu0 0.0
        %629 = vmatprep.subr.mxu0 0.0
        %630 = vmatpush1.msra.mxu0 0.0
        %631 = vmatprep.subr.mxu0 0.0
        %632 = vmatpush1.msra.mxu0 0.0
        %633 = vmatprep.subr.mxu0 0.0
        %634 = vmatpush1.msra.mxu0 0.0
        %635 = vmatprep.subr.mxu0 0.0
        %636 = vmatpush1.msra.mxu0 0.0
        %637 = vmatprep.subr.mxu0 0.0
        %638 = vmatpush1.msra.mxu0 %v600
        %639 = vmatprep.subr.mxu0 0.0
        %640 = vmatpush1.msra.mxu0 %v599
        %641 = vmatprep.subr.mxu0 0.0
        %642 = vmatpush1.msra.mxu0 %v598
        %643 = vmatprep.subr.mxu0 0.0
        %644 = vmatpush1.msra.mxu0 %v597
        %645 = vmatprep.subr.mxu0 0.0
        %646 = vmatpush1.msra.mxu0 %v596
        %647 = vmatprep.subr.mxu0 0.0
        %648 = vmatpush1.msra.mxu0 %v595
        %649 = vmatprep.subr.mxu0 0.0
        %650 = vmatpush1.msra.mxu0 %v594
        %651 = vmatprep.subr.mxu0 0.0
        %652 = vmatpush1.msra.mxu0 %v593
        %653 = vmatprep.subr.mxu0 0.0
        %654 = vmatpush2.msra.mxu0 0.0
        %655 = vmatprep.subr.mxu0 0.0
        %656 = vmatpush2.msra.mxu0 0.0
        %657 = vmatprep.subr.mxu0 0.0
        %658 = vmatpush2.msra.mxu0 0.0
        %659 = vmatprep.subr.mxu0 0.0
        %660 = vmatpush2.msra.mxu0 0.0
        %661 = vmatprep.subr.mxu0 0.0
        %662 = vmatpush2.msra.mxu0 0.0
        %663 = vmatprep.subr.mxu0 0.0
        %664 = vmatpush2.msra.mxu0 0.0
        %665 = vmatprep.subr.mxu0 0.0
        %666 = vmatpush2.msra.mxu0 0.0
        %667 = vmatprep.subr.mxu0 0.0
        %668 = vmatpush2.msra.mxu0 0.0
        %669 = vmatprep.subr.mxu0 0.0
        %670 = vmatpush2.msra.mxu0 0.0
        %671 = vmatprep.subr.mxu0 0.0
        %672 = vmatpush2.msra.mxu0 0.0
        %673 = vmatprep.subr.mxu0 0.0
        %674 = vmatpush2.msra.mxu0 0.0
        %675 = vmatprep.subr.mxu0 0.0
        %676 = vmatpush2.msra.mxu0 0.0
        %677 = vmatprep.subr.mxu0 0.0
        %678 = vmatpush2.msra.mxu0 0.0
        %679 = vmatprep.subr.mxu0 0.0
        %680 = vmatpush2.msra.mxu0 0.0
        %681 = vmatprep.subr.mxu0 0.0
        %682 = vmatpush2.msra.mxu0 0.0
        %683 = vmatprep.subr.mxu0 0.0
        %684 = vmatpush2.msra.mxu0 0.0
        %685 = vmatprep.mubr.f32.mxu0 0.0
        %686 = vmatmul.mubr.f32.gmra.mxu0 %v610
        %v687 = vpop.f32.mrf.mxu0
        %v688 = vadd.f32 %v606, %v687
        %v689 = vpop.f32.mrf.mxu0
        %690 = vmatprep.mubr.f32.mxu0 0.0
        %691 = vmatmul.mubr.f32.gmra.mxu0 %v613
        %v692 = vpop.f32.mrf.mxu0
        %v693 = vadd.f32 %v606, %v692
        %v694 = vpop.f32.mrf.mxu0
        %695 = vmatprep.mubr.f32.mxu0 0.0
        %696 = vmatmul.mubr.f32.gmra.mxu0 %v616
        %v697 = vpop.f32.mrf.mxu0
        %v698 = vadd.f32 %v606, %v697
        %v699 = vpop.f32.mrf.mxu0
        %700 = vmatprep.mubr.f32.mxu0 0.0
        %701 = vmatmul.mubr.f32.gmra.mxu0 %v619
        %v702 = vpop.f32.mrf.mxu0
        %v703 = vadd.f32 %v606, %v702
        %v704 = vpop.f32.mrf.mxu0
        %705 = vdwg.mxu0
        %v706 = vmax.f32 %v688, 0.0
        %v707 = vmax.f32 %v693, 0.0
        %v708 = vmax.f32 %v698, 0.0
        %v709 = vmax.f32 %v703, 0.0
        %v710 = vld [vmem:[%s5] sm:$0xff]
        %v711 = vld [vmem:[%s5 + $0x8] sm:$0xff]
        %v712 = vld [vmem:[%s5 + $0x10] sm:$0xff]
        %v713 = vld [vmem:[%s5 + $0x18] sm:$0xff]
        %v714 = vld [vmem:[%s6] sm:$0x1]
        %v716 = vlaneseq
        %v717 = vshrl.u32 %v716, 7
        %v718 = vsub.s32 0, %v717
        %v719 = vrot.slane %v714, %v718
        %vm721 = vcmask 261120
        %v723 = vsel %vm721, %v706, 0
        %v726 = vsel %vm721, %v707, 0
        %v729 = vsel %vm721, %v708, 0
        %v732 = vsel %vm721, %v709, 0
        %734 = vmatprep.subr.mxu0 0.0
        %735 = vmatpush1.msra.mxu0 0.0
        %736 = vmatprep.subr.mxu0 0.0
        %737 = vmatpush1.msra.mxu0 0.0
        %738 = vmatprep.subr.mxu0 0.0
        %739 = vmatpush1.msra.mxu0 0.0
        %740 = vmatprep.subr.mxu0 0.0
        %741 = vmatpush1.msra.mxu0 0.0
        %742 = vmatprep.subr.mxu0 0.0
        %743 = vmatpush1.msra.mxu0 0.0
        %744 = vmatprep.subr.mxu0 0.0
        %745 = vmatpush1.msra.mxu0 0.0
        %746 = vmatprep.subr.mxu0 0.0
        %747 = vmatpush1.msra.mxu0 0.0
        %748 = vmatprep.subr.mxu0 0.0
        %749 = vmatpush1.msra.mxu0 0.0
        %750 = vmatprep.subr.mxu0 0.0
        %751 = vmatpush1.msra.mxu0 0.0
        %752 = vmatprep.subr.mxu0 0.0
        %753 = vmatpush1.msra.mxu0 0.0
        %754 = vmatprep.subr.mxu0 0.0
        %755 = vmatpush1.msra.mxu0 0.0
        %756 = vmatprep.subr.mxu0 0.0
        %757 = vmatpush1.msra.mxu0 0.0
        %758 = vmatprep.subr.mxu0 0.0
        %759 = vmatpush1.msra.mxu0 %v713
        %760 = vmatprep.subr.mxu0 0.0
        %761 = vmatpush1.msra.mxu0 %v712
        %762 = vmatprep.subr.mxu0 0.0
        %763 = vmatpush1.msra.mxu0 %v711
        %764 = vmatprep.subr.mxu0 0.0
        %765 = vmatpush1.msra.mxu0 %v710
        %766 = vmatprep.subr.mxu0 0.0
        %767 = vmatpush2.msra.mxu0 0.0
        %768 = vmatprep.subr.mxu0 0.0
        %769 = vmatpush2.msra.mxu0 0.0
        %770 = vmatprep.subr.mxu0 0.0
        %771 = vmatpush2.msra.mxu0 0.0
        %772 = vmatprep.subr.mxu0 0.0
        %773 = vmatpush2.msra.mxu0 0.0
        %774 = vmatprep.subr.mxu0 0.0
        %775 = vmatpush2.msra.mxu0 0.0
        %776 = vmatprep.subr.mxu0 0.0
        %777 = vmatpush2.msra.mxu0 0.0
        %778 = vmatprep.subr.mxu0 0.0
        %779 = vmatpush2.msra.mxu0 0.0
        %780 = vmatprep.subr.mxu0 0.0
        %781 = vmatpush2.msra.mxu0 0.0
        %782 = vmatprep.subr.mxu0 0.0
        %783 = vmatpush2.msra.mxu0 0.0
        %784 = vmatprep.subr.mxu0 0.0
        %785 = vmatpush2.msra.mxu0 0.0
        %786 = vmatprep.subr.mxu0 0.0
        %787 = vmatpush2.msra.mxu0 0.0
        %788 = vmatprep.subr.mxu0 0.0
        %789 = vmatpush2.msra.mxu0 0.0
        %790 = vmatprep.subr.mxu0 0.0
        %791 = vmatpush2.msra.mxu0 0.0
        %792 = vmatprep.subr.mxu0 0.0
        %793 = vmatpush2.msra.mxu0 0.0
        %794 = vmatprep.subr.mxu0 0.0
        %795 = vmatpush2.msra.mxu0 0.0
        %796 = vmatprep.subr.mxu0 0.0
        %797 = vmatpush2.msra.mxu0 0.0
        %798 = vmatprep.mubr.f32.mxu0 0.0
        %799 = vmatmul.mubr.f32.gmra.mxu0 %v723
        %v800 = vpop.f32.mrf.mxu0
        %v801 = vadd.f32 %v719, %v800
        %v802 = vpop.f32.mrf.mxu0
        %803 = vmatprep.mubr.f32.mxu0 0.0
        %804 = vmatmul.mubr.f32.gmra.mxu0 %v726
        %v805 = vpop.f32.mrf.mxu0
        %v806 = vadd.f32 %v719, %v805
        %v807 = vpop.f32.mrf.mxu0
        %808 = vmatprep.mubr.f32.mxu0 0.0
        %809 = vmatmul.mubr.f32.gmra.mxu0 %v729
        %v810 = vpop.f32.mrf.mxu0
        %v811 = vadd.f32 %v719, %v810
        %v812 = vpop.f32.mrf.mxu0
        %813 = vmatprep.mubr.f32.mxu0 0.0
        %814 = vmatmul.mubr.f32.gmra.mxu0 %v732
        %v815 = vpop.f32.mrf.mxu0
        %v816 = vadd.f32 %v719, %v815
        %v817 = vpop.f32.mrf.mxu0
        %818 = vdwg.mxu0
        %v819 = vmax.f32 %v801, 0.0
        %v820 = vmax.f32 %v806, 0.0
        %v821 = vmax.f32 %v811, 0.0
        %v822 = vmax.f32 %v816, 0.0
        %v823 = vld [vmem:[%s7] sm:$0xff]
        %v824 = vld [vmem:[%s7 + $0x8] sm:$0xff]
        %v825 = vld [vmem:[%s8] sm:$0x1]
        %v827 = vlaneseq
        %v828 = vshrl.u32 %v827, 7
        %v829 = vsub.s32 0, %v828
        %v830 = vrot.slane %v825, %v829
        %vm832 = vcmask 130048
        %v834 = vsel %vm832, %v819, 0
        %v837 = vsel %vm832, %v820, 0
        %v840 = vsel %vm832, %v821, 0
        %v843 = vsel %vm832, %v822, 0
        %845 = vmatprep.subr.mxu0 0.0
        %846 = vmatpush1.msra.mxu0 0.0
        %847 = vmatprep.subr.mxu0 0.0
        %848 = vmatpush1.msra.mxu0 0.0
        %849 = vmatprep.subr.mxu0 0.0
        %850 = vmatpush1.msra.mxu0 0.0
        %851 = vmatprep.subr.mxu0 0.0
        %852 = vmatpush1.msra.mxu0 0.0
        %853 = vmatprep.subr.mxu0 0.0
        %854 = vmatpush1.msra.mxu0 0.0
        %855 = vmatprep.subr.mxu0 0.0
        %856 = vmatpush1.msra.mxu0 0.0
        %857 = vmatprep.subr.mxu0 0.0
        %858 = vmatpush1.msra.mxu0 0.0
        %859 = vmatprep.subr.mxu0 0.0
        %860 = vmatpush1.msra.mxu0 0.0
        %861 = vmatprep.subr.mxu0 0.0
        %862 = vmatpush1.msra.mxu0 0.0
        %863 = vmatprep.subr.mxu0 0.0
        %864 = vmatpush1.msra.mxu0 0.0
        %865 = vmatprep.subr.mxu0 0.0
        %866 = vmatpush1.msra.mxu0 0.0
        %867 = vmatprep.subr.mxu0 0.0
        %868 = vmatpush1.msra.mxu0 0.0
        %869 = vmatprep.subr.mxu0 0.0
        %870 = vmatpush1.msra.mxu0 0.0
        %871 = vmatprep.subr.mxu0 0.0
        %872 = vmatpush1.msra.mxu0 0.0
        %873 = vmatprep.subr.mxu0 0.0
        %874 = vmatpush1.msra.mxu0 %v824
        %875 = vmatprep.subr.mxu0 0.0
        %876 = vmatpush1.msra.mxu0 %v823
        %877 = vmatprep.subr.mxu0 0.0
        %878 = vmatpush2.msra.mxu0 0.0
        %879 = vmatprep.subr.mxu0 0.0
        %880 = vmatpush2.msra.mxu0 0.0
        %881 = vmatprep.subr.mxu0 0.0
        %882 = vmatpush2.msra.mxu0 0.0
        %883 = vmatprep.subr.mxu0 0.0
        %884 = vmatpush2.msra.mxu0 0.0
        %885 = vmatprep.subr.mxu0 0.0
        %886 = vmatpush2.msra.mxu0 0.0
        %887 = vmatprep.subr.mxu0 0.0
        %888 = vmatpush2.msra.mxu0 0.0
        %889 = vmatprep.subr.mxu0 0.0
        %890 = vmatpush2.msra.mxu0 0.0
        %891 = vmatprep.subr.mxu0 0.0
        %892 = vmatpush2.msra.mxu0 0.0
        %893 = vmatprep.subr.mxu0 0.0
        %894 = vmatpush2.msra.mxu0 0.0
        %895 = vmatprep.subr.mxu0 0.0
        %896 = vmatpush2.msra.mxu0 0.0
        %897 = vmatprep.subr.mxu0 0.0
        %898 = vmatpush2.msra.mxu0 0.0
        %899 = vmatprep.subr.mxu0 0.0
        %900 = vmatpush2.msra.mxu0 0.0
        %901 = vmatprep.subr.mxu0 0.0
        %902 = vmatpush2.msra.mxu0 0.0
        %903 = vmatprep.subr.mxu0 0.0
        %904 = vmatpush2.msra.mxu0 0.0
        %905 = vmatprep.subr.mxu0 0.0
        %906 = vmatpush2.msra.mxu0 0.0
        %907 = vmatprep.subr.mxu0 0.0
        %908 = vmatpush2.msra.mxu0 0.0
        %909 = vmatprep.mubr.f32.mxu0 0.0
        %910 = vmatmul.mubr.f32.gmra.mxu0 %v834
        %v911 = vpop.f32.mrf.mxu0
        %v912 = vadd.f32 %v830, %v911
        %v913 = vpop.f32.mrf.mxu0
        %914 = vmatprep.mubr.f32.mxu0 0.0
        %915 = vmatmul.mubr.f32.gmra.mxu0 %v837
        %v916 = vpop.f32.mrf.mxu0
        %v917 = vadd.f32 %v830, %v916
        %v918 = vpop.f32.mrf.mxu0
        %919 = vmatprep.mubr.f32.mxu0 0.0
        %920 = vmatmul.mubr.f32.gmra.mxu0 %v840
        %v921 = vpop.f32.mrf.mxu0
        %v922 = vadd.f32 %v830, %v921
        %v923 = vpop.f32.mrf.mxu0
        %924 = vmatprep.mubr.f32.mxu0 0.0
        %925 = vmatmul.mubr.f32.gmra.mxu0 %v843
        %v926 = vpop.f32.mrf.mxu0
        %v927 = vadd.f32 %v830, %v926
        %v928 = vpop.f32.mrf.mxu0
        %929 = vdwg.mxu0
        %v930 = vld [vmem:[%s9] sm:$0xff]
        %v931 = vld [vmem:[%s9 + $0x8] sm:$0xff]
        %v932 = vld [vmem:[%s10] sm:$0x1]
        %v934 = vlaneseq
        %v935 = vshrl.u32 %v934, 7
        %v936 = vsub.s32 0, %v935
        %v937 = vrot.slane %v932, %v936
        %939 = vmatprep.subr.mxu0 0.0
        %940 = vmatpush1.msra.mxu0 0.0
        %941 = vmatprep.subr.mxu0 0.0
        %942 = vmatpush1.msra.mxu0 0.0
        %943 = vmatprep.subr.mxu0 0.0
        %944 = vmatpush1.msra.mxu0 0.0
        %945 = vmatprep.subr.mxu0 0.0
        %946 = vmatpush1.msra.mxu0 0.0
        %947 = vmatprep.subr.mxu0 0.0
        %948 = vmatpush1.msra.mxu0 0.0
        %949 = vmatprep.subr.mxu0 0.0
        %950 = vmatpush1.msra.mxu0 0.0
        %951 = vmatprep.subr.mxu0 0.0
        %952 = vmatpush1.msra.mxu0 0.0
        %953 = vmatprep.subr.mxu0 0.0
        %954 = vmatpush1.msra.mxu0 0.0
        %955 = vmatprep.subr.mxu0 0.0
        %956 = vmatpush1.msra.mxu0 0.0
        %957 = vmatprep.subr.mxu0 0.0
        %958 = vmatpush1.msra.mxu0 0.0
        %959 = vmatprep.subr.mxu0 0.0
        %960 = vmatpush1.msra.mxu0 0.0
        %961 = vmatprep.subr.mxu0 0.0
        %962 = vmatpush1.msra.mxu0 0.0
        %963 = vmatprep.subr.mxu0 0.0
        %964 = vmatpush1.msra.mxu0 0.0
        %965 = vmatprep.subr.mxu0 0.0
        %966 = vmatpush1.msra.mxu0 0.0
        %967 = vmatprep.subr.mxu0 0.0
        %968 = vmatpush1.msra.mxu0 %v931
        %969 = vmatprep.subr.mxu0 0.0
        %970 = vmatpush1.msra.mxu0 %v930
        %971 = vmatprep.subr.mxu0 0.0
        %972 = vmatpush2.msra.mxu0 0.0
        %973 = vmatprep.subr.mxu0 0.0
        %974 = vmatpush2.msra.mxu0 0.0
        %975 = vmatprep.subr.mxu0 0.0
        %976 = vmatpush2.msra.mxu0 0.0
        %977 = vmatprep.subr.mxu0 0.0
        %978 = vmatpush2.msra.mxu0 0.0
        %979 = vmatprep.subr.mxu0 0.0
        %980 = vmatpush2.msra.mxu0 0.0
        %981 = vmatprep.subr.mxu0 0.0
        %982 = vmatpush2.msra.mxu0 0.0
        %983 = vmatprep.subr.mxu0 0.0
        %984 = vmatpush2.msra.mxu0 0.0
        %985 = vmatprep.subr.mxu0 0.0
        %986 = vmatpush2.msra.mxu0 0.0
        %987 = vmatprep.subr.mxu0 0.0
        %988 = vmatpush2.msra.mxu0 0.0
        %989 = vmatprep.subr.mxu0 0.0
        %990 = vmatpush2.msra.mxu0 0.0
        %991 = vmatprep.subr.mxu0 0.0
        %992 = vmatpush2.msra.mxu0 0.0
        %993 = vmatprep.subr.mxu0 0.0
        %994 = vmatpush2.msra.mxu0 0.0
        %995 = vmatprep.subr.mxu0 0.0
        %996 = vmatpush2.msra.mxu0 0.0
        %997 = vmatprep.subr.mxu0 0.0
        %998 = vmatpush2.msra.mxu0 0.0
        %999 = vmatprep.subr.mxu0 0.0
        %1000 = vmatpush2.msra.mxu0 0.0
        %1001 = vmatprep.subr.mxu0 0.0
        %1002 = vmatpush2.msra.mxu0 0.0
        %1003 = vmatprep.mubr.f32.mxu0 0.0
        %1004 = vmatmul.mubr.f32.gmra.mxu0 %v834
        %v1005 = vpop.f32.mrf.mxu0
        %v1006 = vadd.f32 %v937, %v1005
        %v1007 = vpop.f32.mrf.mxu0
        %1008 = vmatprep.mubr.f32.mxu0 0.0
        %1009 = vmatmul.mubr.f32.gmra.mxu0 %v837
        %v1010 = vpop.f32.mrf.mxu0
        %v1011 = vadd.f32 %v937, %v1010
        %v1012 = vpop.f32.mrf.mxu0
        %1013 = vmatprep.mubr.f32.mxu0 0.0
        %1014 = vmatmul.mubr.f32.gmra.mxu0 %v840
        %v1015 = vpop.f32.mrf.mxu0
        %v1016 = vadd.f32 %v937, %v1015
        %v1017 = vpop.f32.mrf.mxu0
        %1018 = vmatprep.mubr.f32.mxu0 0.0
        %1019 = vmatmul.mubr.f32.gmra.mxu0 %v843
        %v1020 = vpop.f32.mrf.mxu0
        %v1021 = vadd.f32 %v937, %v1020
        %v1022 = vpop.f32.mrf.mxu0
        %1023 = vdwg.mxu0
        %v1024 = vmax.f32 %v1006, -10.0
        %v1025 = vmax.f32 %v1011, -10.0
        %v1026 = vmax.f32 %v1016, -10.0
        %v1027 = vmax.f32 %v1021, -10.0
        %v1028 = vmin.f32 %v1024, 10.0
        %v1029 = vmin.f32 %v1025, 10.0
        %v1030 = vmin.f32 %v1026, 10.0
        %v1031 = vmin.f32 %v1027, 10.0
        %v1032 = vmul.f32 %v1028, 0.5
        %v1033 = vmul.f32 %v1029, 0.5
        %v1034 = vmul.f32 %v1030, 0.5
        %v1035 = vmul.f32 %v1031, 0.5
        %v1036 = vmul.f32 %v1032, 1.442695
        %v1037 = vpow.pop %v1036
        %v1038 = vmul.f32 %v1033, 1.442695
        %v1039 = vpow.pop %v1038
        %v1040 = vmul.f32 %v1034, 1.442695
        %v1041 = vpow.pop %v1040
        %v1042 = vmul.f32 %v1035, 1.442695
        %v1043 = vpow.pop %v1042
        %v1044 = vld [vmem:[%s466] sm:$0xff]
        %v1045 = vld [vmem:[%s466 + $0x8] sm:$0xff]
        %v1046 = vld [vmem:[%s466 + $0x10] sm:$0xff]
        %v1047 = vld [vmem:[%s466 + $0x18] sm:$0xff]
        %v1048 = vmul.f32 %v1037, %v1044
        %v1049 = vmul.f32 %v1039, %v1045
        %v1050 = vmul.f32 %v1041, %v1046
        %v1051 = vmul.f32 %v1043, %v1047
        %v1052 = vadd.f32 %v912, %v1048
        %v1053 = vadd.f32 %v917, %v1049
        %v1054 = vadd.f32 %v922, %v1050
        %v1055 = vadd.f32 %v927, %v1051
        %vm1056 = vcmask 64512
        %1057 = vst.msk [vmem:[%s443] sm:$0xff] %vm1056, %v1052
        %1058 = vst.msk [vmem:[%s443 + $0x8] sm:$0xff] %vm1056, %v1053
        %1059 = vst.msk [vmem:[%s443 + $0x10] sm:$0xff] %vm1056, %v1054
        %1060 = vst.msk [vmem:[%s443 + $0x18] sm:$0xff] %vm1056, %v1055
        %s1061 = sand.u32 %s293, 1
        %s1062 = sand.u32 %s293, 1
        %s1063 = smul.addr %s1062, 32
        %s1064 = scalar_lea.vmem [#allocation2], %s1063
        // Predicated region
        $region69: #{tpu_custom_call.1} parent=67 // pred_check
          %p1065 = pneg %p303
        $region70: #{tpu_custom_call.1} parent=67 // pred_check_branch
          %1067 = sbr.rel (%p1065) target = $region72
        $region71: #{tpu_custom_call.1} parent=67 // pred_region
          %s1068 = smul.u32 4, %s23
          %s1069 = ssub.s32 13, %s1068
          %p1070 = scmp.lt.s32.totalorder %s1069, 4
          %s1071 = scalar_select %p1070, %s1069, 4
          %s1072 = smul.u32 128, %s1071
          %p1073 = scmp.ne.s32.totalorder 0, %s1072
          %s1074 = smul.addr %s1068, 8
          %s1075 = scalar_lea.vmem %s12, %s1074
          // Predicated region
          $region73: #{tpu_custom_call.1} parent=71 // pred_check
            %p1076 = pneg %p1073
          $region74: #{tpu_custom_call.1} parent=71 // pred_check_branch
            %1078 = sbr.rel (%p1076) target = $region76
          $region75: #{tpu_custom_call.1} parent=71 // pred_region
            // Predicated region
            $region77: #{tpu_custom_call.1} parent=75 // pred_check
              _
            $region78: #{tpu_custom_call.1} parent=75 // pred_check_branch
              %1080 = sbr.rel (0) target = $region80
            $region79: #{tpu_custom_call.1} parent=75 // pred_region
              // Predicated region
              $region99: #{tpu_custom_call.1} parent=79 // pred_check
                _
              $region100: #{tpu_custom_call.1} parent=79 // pred_check_branch
                %1136 = sbr.rel (0) target = $region102
              $region101: #{tpu_custom_call.1} parent=79 // pred_region
                %s1137 = sshrl.u32 %s1071, 2
                // While loop
                $region103: #{tpu_custom_call.1} parent=101 // loop_pre_header
                  _
                $region104: #{tpu_custom_call.1} parent=101 // loop_header
                  %s1139 = sphi 0, %s1141
                  %p1140 = scmp.ge.s32.totalorder %s1139, %s1137
                  %s1144 = sphi 0, %s1157
                  %s1145 = sphi %s1064, %s1160
                  %s1146 = sphi %s1075, %s1161
                $region105: #{tpu_custom_call.1} parent=101 // loop_header_branch
                  %1143 = sbr.rel (%p1140) target = $region109
                $region106: #{tpu_custom_call.1} parent=101 // loop_body
                  %v1147 = vld [vmem:[%s1145] sm:$0xff]
                  %1148 = vst [vmem:[%s1146] sm:$0xff] %v1147
                  %v1149 = vld [vmem:[%s1145 + $0x8] sm:$0xff]
                  %1150 = vst [vmem:[%s1146 + $0x8] sm:$0xff] %v1149
                  %v1151 = vld [vmem:[%s1145 + $0x10] sm:$0xff]
                  %1152 = vst [vmem:[%s1146 + $0x10] sm:$0xff] %v1151
                  %v1153 = vld [vmem:[%s1145 + $0x18] sm:$0xff]
                  %1154 = vst [vmem:[%s1146 + $0x18] sm:$0xff] %v1153
                  %s1155 = sadd.s32 1, %s1144
                  %p1156 = scmp.ge.s32.totalorder %s1155, %s1137
                  %s1157 = scalar_select %p1156, 0, %s1155
                  %s1158 = smul.u32 %s1157, 32
                  %s1159 = smul.u32 %s1157, 32
                  %s1160 = scalar_lea.vmem %s1064, %s1158 [#allocation2]
                  %s1161 = scalar_lea.vmem %s1075, %s1159
                $region107: #{tpu_custom_call.1} parent=101 // loop_footer
                  %s1141 = sadd.s32 %s1139, 1
                $region108: #{tpu_custom_call.1} parent=101 // loop_footer_branch
                  %1138 = sbr.rel target = $region104
                $region109: #{tpu_custom_call.1} parent=101 // loop_exit
                  _
                %s1162 = sshrl.u32 %s1071, 2
                %s1163 = sand.u32 %s1071, 3
                %s1164 = smul.u32 %s1162, 4
                %s1165 = smul.u32 8, %s1164
                %s1166 = scalar_lea.vmem %s1064, %s1165 [#allocation2]
                %s1167 = smul.u32 8, %s1164
                %s1168 = scalar_lea.vmem %s1075, %s1167
                // While loop
                $region110: #{tpu_custom_call.1} parent=101 // loop_pre_header
                  _
                $region111: #{tpu_custom_call.1} parent=101 // loop_header
                  %s1170 = sphi 0, %s1172
                  %p1171 = scmp.ge.s32.totalorder %s1170, %s1163
                  %s1175 = sphi 0, %s1182
                  %s1176 = sphi %s1166, %s1185
                  %s1177 = sphi %s1168, %s1186
                $region112: #{tpu_custom_call.1} parent=101 // loop_header_branch
                  %1174 = sbr.rel (%p1171) target = $region116
                $region113: #{tpu_custom_call.1} parent=101 // loop_body
                  %v1178 = vld [vmem:[%s1176] sm:$0xff]
                  %1179 = vst [vmem:[%s1177] sm:$0xff] %v1178
                  %s1180 = sadd.s32 1, %s1175
                  %p1181 = scmp.ge.s32.totalorder %s1180, %s1163
                  %s1182 = scalar_select %p1181, 0, %s1180
                  %s1183 = smul.u32 %s1182, 8
                  %s1184 = smul.u32 %s1182, 8
                  %s1185 = scalar_lea.vmem %s1166, %s1183 [#allocation2]
                  %s1186 = scalar_lea.vmem %s1168, %s1184
                $region114: #{tpu_custom_call.1} parent=101 // loop_footer
                  %s1172 = sadd.s32 %s1170, 1
                $region115: #{tpu_custom_call.1} parent=101 // loop_footer_branch
                  %1169 = sbr.rel target = $region111
                $region116: #{tpu_custom_call.1} parent=101 // loop_exit
                  _
              $region102: #{tpu_custom_call.1} parent=79 // pred_fallthru
                _
              // Predicated region
              $region117: #{tpu_custom_call.1} parent=79 // pred_check
                _
              $region118: #{tpu_custom_call.1} parent=79 // pred_check_branch
                %1188 = sbr.rel target = $region120
              $region119: #{tpu_custom_call.1} parent=79 // pred_region
                _
              $region120: #{tpu_custom_call.1} parent=79 // pred_fallthru
                _
            $region80: #{tpu_custom_call.1} parent=75 // pred_fallthru
              _
            // Predicated region
            $region81: #{tpu_custom_call.1} parent=75 // pred_check
              _
            $region82: #{tpu_custom_call.1} parent=75 // pred_check_branch
              %1082 = sbr.rel target = $region84
            $region83: #{tpu_custom_call.1} parent=75 // pred_region
              %s1084 = ssub.s32 256, 1
              %s1085 = sshrl.u32 %s1071, 2
              // While loop
              $region85: #{tpu_custom_call.1} parent=83 // loop_pre_header
                _
              $region86: #{tpu_custom_call.1} parent=83 // loop_header
                %s1087 = sphi 0, %s1089
                %p1088 = scmp.ge.s32.totalorder %s1087, %s1085
                %s1092 = sphi 0, %s1105
                %s1093 = sphi %s1064, %s1108
                %s1094 = sphi %s1075, %s1109
              $region87: #{tpu_custom_call.1} parent=83 // loop_header_branch
                %1091 = sbr.rel (%p1088) target = $region91
              $region88: #{tpu_custom_call.1} parent=83 // loop_body
                %v1095 = vld [vmem:[%s1093] sm:%s1084]
                %1096 = vst [vmem:[%s1094] sm:%s1084] %v1095
                %v1097 = vld [vmem:[%s1093 + $0x8] sm:%s1084]
                %1098 = vst [vmem:[%s1094 + $0x8] sm:%s1084] %v1097
                %v1099 = vld [vmem:[%s1093 + $0x10] sm:%s1084]
                %1100 = vst [vmem:[%s1094 + $0x10] sm:%s1084] %v1099
                %v1101 = vld [vmem:[%s1093 + $0x18] sm:%s1084]
                %1102 = vst [vmem:[%s1094 + $0x18] sm:%s1084] %v1101
                %s1103 = sadd.s32 1, %s1092
                %p1104 = scmp.ge.s32.totalorder %s1103, %s1085
                %s1105 = scalar_select %p1104, 0, %s1103
                %s1106 = smul.u32 %s1105, 32
                %s1107 = smul.u32 %s1105, 32
                %s1108 = scalar_lea.vmem %s1064, %s1106 [#allocation2]
                %s1109 = scalar_lea.vmem %s1075, %s1107
              $region89: #{tpu_custom_call.1} parent=83 // loop_footer
                %s1089 = sadd.s32 %s1087, 1
              $region90: #{tpu_custom_call.1} parent=83 // loop_footer_branch
                %1086 = sbr.rel target = $region86
              $region91: #{tpu_custom_call.1} parent=83 // loop_exit
                _
              %s1110 = sshrl.u32 %s1071, 2
              %s1111 = sand.u32 %s1071, 3
              %s1112 = smul.u32 %s1110, 4
              %s1113 = smul.u32 8, %s1112
              %s1114 = scalar_lea.vmem %s1064, %s1113 [#allocation2]
              %s1115 = smul.u32 8, %s1112
              %s1116 = scalar_lea.vmem %s1075, %s1115
              // While loop
              $region92: #{tpu_custom_call.1} parent=83 // loop_pre_header
                _
              $region93: #{tpu_custom_call.1} parent=83 // loop_header
                %s1118 = sphi 0, %s1120
                %p1119 = scmp.ge.s32.totalorder %s1118, %s1111
                %s1123 = sphi 0, %s1130
                %s1124 = sphi %s1114, %s1133
                %s1125 = sphi %s1116, %s1134
              $region94: #{tpu_custom_call.1} parent=83 // loop_header_branch
                %1122 = sbr.rel (%p1119) target = $region98
              $region95: #{tpu_custom_call.1} parent=83 // loop_body
                %v1126 = vld [vmem:[%s1124] sm:%s1084]
                %1127 = vst [vmem:[%s1125] sm:%s1084] %v1126
                %s1128 = sadd.s32 1, %s1123
                %p1129 = scmp.ge.s32.totalorder %s1128, %s1111
                %s1130 = scalar_select %p1129, 0, %s1128
                %s1131 = smul.u32 %s1130, 8
                %s1132 = smul.u32 %s1130, 8
                %s1133 = scalar_lea.vmem %s1114, %s1131 [#allocation2]
                %s1134 = scalar_lea.vmem %s1116, %s1132
              $region96: #{tpu_custom_call.1} parent=83 // loop_footer
                %s1120 = sadd.s32 %s1118, 1
              $region97: #{tpu_custom_call.1} parent=83 // loop_footer_branch
                %1117 = sbr.rel target = $region93
              $region98: #{tpu_custom_call.1} parent=83 // loop_exit
                _
            $region84: #{tpu_custom_call.1} parent=75 // pred_fallthru
              _
          $region76: #{tpu_custom_call.1} parent=71 // pred_fallthru
            _
          %1189 = vnop
        $region72: #{tpu_custom_call.1} parent=67 // pred_fallthru
          _
      $region68: #{tpu_custom_call.1} parent=5 // pred_fallthru
        _
      %p1190 = scmp.le.s32.totalorder 2, %s18
      // Predicated region
      $region121: #{tpu_custom_call.1} parent=5 // pred_check
        %p1191 = pneg %p1190
      $region122: #{tpu_custom_call.1} parent=5 // pred_check_branch
        %1193 = sbr.rel (%p1191) target = $region124
      $region123: #{tpu_custom_call.1} parent=5 // pred_region
        %s1194 = ssub.s32 %s18, 2
        // Predicated region
        $region125: #{tpu_custom_call.1} parent=123 // pred_check
          %p1195 = pneg %p309
        $region126: #{tpu_custom_call.1} parent=123 // pred_check_branch
          %1197 = sbr.rel (%p1195) target = $region128
        $region127: #{tpu_custom_call.1} parent=123 // pred_region
          %s1198 = sand.u32 %s294, 1
          %s1199 = sand.u32 %s294, 1
          %s1200 = smul.addr %s1199, 32
          %s1201 = scalar_lea.vmem [#allocation2], %s1200
        $region128: #{tpu_custom_call.1} parent=123 // pred_fallthru
          _
      $region124: #{tpu_custom_call.1} parent=5 // pred_fallthru
        _
    $region6: #{tpu_custom_call.1} parent=1 // loop_footer
      %s22 = sadd.s32 1, %s18
    $region7: #{tpu_custom_call.1} parent=1 // loop_footer_branch
      %17 = sbr.rel target = $region3
    $region8: #{tpu_custom_call.1} parent=1 // loop_exit
      _

</llo_original>
